<compile_context>
chip_gen: v7x
topology: tpu7x:2x2x1
jax: 0.10.0
libtpu: 0.0.40
codegen_flags: <defaults>
</compile_context>

<pallas_src>
import functools

import jax
import jax.numpy as jnp
from jax.experimental import pallas as pl
from jax.experimental.pallas import tpu as pltpu

_LANE = 128
_SUBLANE = 8
_NEG_MASK = -1e30  # finite "minus infinity" for masked softmax columns

# VMEM budgets (bytes) used when picking tile sizes; kept well under the
# vmem_limit_bytes handed to the compiler.
_LINEAR_TILE_BUDGET = 28 << 20     # x + w + out tiles (double buffered)
_FLAT_W_BUDGET = 12 << 20          # double-buffered weight block, flat-CE path
_FULLV_SOFTMAX_BUDGET = 16 << 20   # whole-V softmax block footprint threshold


def _compute_vmem_limit():
    """Scoped-VMEM limit: ~75% of physical (v5e/v6e ~96 MiB, v7x ~48 MiB)."""
    try:
        cap = pltpu.get_tpu_info().vmem_capacity_bytes
        return int(min(cap * 3 // 4, 100 << 20))
    except Exception:
        return 48 << 20


_VMEM_LIMIT = _compute_vmem_limit()


def _round_up(x, m):
    return (x + m - 1) // m * m


def _largest_divisor_leq(n, cap):
    for t in range(min(cap, n), 0, -1):
        if n % t == 0:
            return t
    return 1


def _pick_col_tile(Vp, max_tn):
    """Largest multiple of 128 that divides Vp and is <= max_tn (>= 128)."""
    tn = max(min(max_tn, Vp), _LANE)
    tn -= tn % _LANE
    tn = max(tn, _LANE)
    while Vp % tn:
        tn -= _LANE
    return tn


def _use_full_v_softmax(D, Vp):
    """Whole-V log_softmax block only when it comfortably fits VMEM."""
    tm = 128
    w_bytes = D * Vp * 2 * 2        # bf16 weight block, double buffered
    out_bytes = tm * Vp * 4 * 2     # f32 out tile, double buffered
    tmp_bytes = 3 * tm * Vp * 4     # logits / exp temporaries (spill)
    return Vp <= 4096 and (w_bytes + out_bytes + tmp_bytes) <= _FULLV_SOFTMAX_BUDGET


# --------------------------------------------------------------------------
# Kernels
# --------------------------------------------------------------------------

def _linear_bias_kernel(x_ref, w_ref, b_ref, o_ref):
    """One (tm, tn) output tile of  x @ w + b.  bf16 operands, f32 accum."""
    y = jnp.dot(x_ref[...], w_ref[...], preferred_element_type=jnp.float32)
    o_ref[...] = (y + b_ref[...]).astype(o_ref.dtype)


def _linear_logsoftmax_full_kernel(x_ref, w_ref, b_ref, o_ref, *, valid_v):
    """log_softmax(x @ w + b), whole vocab in one block (small V only)."""
    y = jnp.dot(x_ref[...], w_ref[...], preferred_element_type=jnp.float32)
    y = y + b_ref[...]
    if valid_v < y.shape[-1]:
        col = jax.lax.broadcasted_iota(jnp.int32, y.shape, 1)
        y = jnp.where(col < valid_v, y, _NEG_MASK)
    m = jnp.max(y, axis=-1, keepdims=True)
    z = y - m
    lse = jnp.log(jnp.sum(jnp.exp(z), axis=-1, keepdims=True))
    o_ref[...] = (z - lse).astype(o_ref.dtype)


def _linear_logsoftmax_tiled_kernel(x_ref, w_ref, b_ref, o_ref, m_ref, l_ref,
                                    *, valid_v, total_v, tn):
    """V-tiled two-pass log_softmax.

    Grid = (M tiles, pass in {0,1}, V tiles).  Pass 0 streams the vocab tiles
    and maintains a running max / rescaled exp-sum in VMEM scratch; pass 1
    recomputes each logit tile and writes  y - (m + log(l)).  The output
    index_map maps all of pass 0 onto block (i, 0) so no placeholder tiles are
    flushed to HBM.
    """
    p = pl.program_id(1)
    j = pl.program_id(2)

    y = jnp.dot(x_ref[...], w_ref[...], preferred_element_type=jnp.float32)
    y = y + b_ref[...]
    if valid_v < total_v:
        col = jax.lax.broadcasted_iota(jnp.int32, y.shape, 1) + j * tn
        y = jnp.where(col < valid_v, y, _NEG_MASK)

    @pl.when(jnp.logical_and(p == 0, j == 0))
    def _():
        m_ref[...] = jnp.full_like(m_ref, _NEG_MASK)
        l_ref[...] = jnp.zeros_like(l_ref)

    @pl.when(p == 0)
    def _():
        m_prev = m_ref[...]
        m_new = jnp.maximum(m_prev, jnp.max(y, axis=-1, keepdims=True))
        l_ref[...] = (l_ref[...] * jnp.exp(m_prev - m_new)
                      + jnp.sum(jnp.exp(y - m_new), axis=-1, keepdims=True))
        m_ref[...] = m_new

    @pl.when(p == 1)
    def _():
        lse = m_ref[...] + jnp.log(l_ref[...])
        o_ref[...] = (y - lse).astype(o_ref.dtype)


def _flat_linear_kernel(x_ref, w_ref, b_ref, o_ref, acc_ref, *, ts):
    """Flattened-CE branch:  out[n, v] = sum_s x[s, n, :] @ W[s, :, v] + b[v].

    ts sequence steps are fused per grid iteration (static unroll); the grid
    is (V tiles [parallel], S/ts [arbitrary reduction]) with an f32 VMEM
    accumulator.  This folds PyTorch's transpose(0,1).view(N, S*D) into the
    grid without re-laying-out the activation in HBM.
    """
    s = pl.program_id(1)

    @pl.when(s == 0)
    def _():
        acc_ref[...] = jnp.zeros_like(acc_ref)

    partial = jnp.dot(x_ref[0], w_ref[0], preferred_element_type=jnp.float32)
    for si in range(1, ts):
        partial = partial + jnp.dot(x_ref[si], w_ref[si],
                                    preferred_element_type=jnp.float32)
    acc_ref[...] += partial

    @pl.when(s == pl.num_programs(1) - 1)
    def _():
        o_ref[...] = (acc_ref[...] + b_ref[...]).astype(o_ref.dtype)


# --------------------------------------------------------------------------
# Cached pallas_call builders (weights/bias arrive pre-padded, bf16/f32)
# --------------------------------------------------------------------------

@functools.lru_cache(maxsize=None)
def _build_linear_call(M, D, V, Vp, out_dtype):
    """fn(x2d (M,D) f32, w_pad (D,Vp) bf16, b_pad (1,Vp) f32) -> (M,V)."""
    tn = _pick_col_tile(Vp, 512)
    max_tm = 512
    while max_tm > 64 and (max_tm * D * 4 + D * tn * 4 + max_tm * tn * 8) > _LINEAR_TILE_BUDGET:
        max_tm //= 2
    tm = min(max_tm, _round_up(M, _SUBLANE))
    Mp = _round_up(M, tm)

    out_bytes = jnp.dtype(out_dtype).itemsize
    cost = pl.CostEstimate(
        flops=2 * Mp * D * Vp,
        transcendentals=0,
        bytes_accessed=((Mp // tm) * D * Vp * 2 + Mp * D * 2 + Vp * 4
                        + Mp * Vp * out_bytes))

    call = pl.pallas_call(
        _linear_bias_kernel,
        out_shape=jax.ShapeDtypeStruct((Mp, Vp), out_dtype),
        grid=(Mp // tm, Vp // tn),
        in_specs=[
            pl.BlockSpec((tm, D), lambda i, j: (i, 0)),
            pl.BlockSpec((D, tn), lambda i, j: (0, j)),
            pl.BlockSpec((1, tn), lambda i, j: (0, j)),
        ],
        out_specs=pl.BlockSpec((tm, tn), lambda i, j: (i, j)),
        compiler_params=pltpu.CompilerParams(
            dimension_semantics=("parallel", "parallel"),
            vmem_limit_bytes=_VMEM_LIMIT),
        cost_estimate=cost,
    )

    def fn(x2d, w_pad, b_pad):
        xb = jnp.pad(x2d.astype(jnp.bfloat16), ((0, Mp - M), (0, 0)))
        return call(xb, w_pad, b_pad)[:M, :V]

    return jax.jit(fn)


@functools.lru_cache(maxsize=None)
def _build_logsoftmax_full_call(M, D, V, Vp, out_dtype):
    """Whole-V log_softmax (small vocab).  fn(x2d, w_pad, b_pad) -> (M,V)."""
    tm = min(128, _round_up(M, _SUBLANE))
    Mp = _round_up(M, tm)

    out_bytes = jnp.dtype(out_dtype).itemsize
    cost = pl.CostEstimate(
        flops=2 * Mp * D * Vp,
        transcendentals=Mp * Vp,
        bytes_accessed=((Mp // tm) * D * Vp * 2 + Mp * D * 2 + Vp * 4
                        + Mp * Vp * out_bytes))

    call = pl.pallas_call(
        functools.partial(_linear_logsoftmax_full_kernel, valid_v=V),
        out_shape=jax.ShapeDtypeStruct((Mp, Vp), out_dtype),
        grid=(Mp // tm,),
        in_specs=[
            pl.BlockSpec((tm, D), lambda i: (i, 0)),
            pl.BlockSpec((D, Vp), lambda i: (0, 0)),
            pl.BlockSpec((1, Vp), lambda i: (0, 0)),
        ],
        out_specs=pl.BlockSpec((tm, Vp), lambda i: (i, 0)),
        compiler_params=pltpu.CompilerParams(
            dimension_semantics=("parallel",),
            vmem_limit_bytes=_VMEM_LIMIT),
        cost_estimate=cost,
    )

    def fn(x2d, w_pad, b_pad):
        xb = jnp.pad(x2d.astype(jnp.bfloat16), ((0, Mp - M), (0, 0)))
        return call(xb, w_pad, b_pad)[:M, :V]

    return jax.jit(fn)


@functools.lru_cache(maxsize=None)
def _build_logsoftmax_tiled_call(M, D, V, Vp, out_dtype):
    """V-tiled two-pass log_softmax (large vocab).  fn(x2d, w_pad, b_pad)."""
    tm = min(256, _round_up(M, _SUBLANE))
    Mp = _round_up(M, tm)
    tn = _pick_col_tile(Vp, 512)
    nv = Vp // tn

    out_bytes = jnp.dtype(out_dtype).itemsize
    cost = pl.CostEstimate(
        flops=2 * 2 * Mp * D * Vp,                  # logits recomputed in pass 2
        transcendentals=2 * Mp * Vp,
        bytes_accessed=(2 * (Mp // tm) * D * Vp * 2 + Mp * D * 2 + Vp * 4
                        + Mp * Vp * out_bytes))

    kernel = functools.partial(_linear_logsoftmax_tiled_kernel,
                               valid_v=V, total_v=Vp, tn=tn)

    call = pl.pallas_call(
        kernel,
        out_shape=jax.ShapeDtypeStruct((Mp, Vp), out_dtype),
        grid=(Mp // tm, 2, nv),
        in_specs=[
            pl.BlockSpec((tm, D), lambda i, p, j: (i, 0)),
            pl.BlockSpec((D, tn), lambda i, p, j: (0, j)),
            pl.BlockSpec((1, tn), lambda i, p, j: (0, j)),
        ],
        # During pass 0 every step maps onto block (i, 0) so the output buffer
        # is never flushed with placeholder data; pass 1 writes every tile.
        out_specs=pl.BlockSpec((tm, tn), lambda i, p, j: (i, j * p)),
        scratch_shapes=[pltpu.VMEM((tm, 1), jnp.float32),
                        pltpu.VMEM((tm, 1), jnp.float32)],
        compiler_params=pltpu.CompilerParams(
            dimension_semantics=("parallel", "arbitrary", "arbitrary"),
            vmem_limit_bytes=_VMEM_LIMIT),
        cost_estimate=cost,
    )

    def fn(x2d, w_pad, b_pad):
        xb = jnp.pad(x2d.astype(jnp.bfloat16), ((0, Mp - M), (0, 0)))
        return call(xb, w_pad, b_pad)[:M, :V]

    return jax.jit(fn)


@functools.lru_cache(maxsize=None)
def _build_flat_linear_call(S, N, D, V, Vp, out_dtype):
    """fn(x (S,N,D) f32, w3 (S,D,Vp) bf16, b_pad (1,Vp) f32) -> (N,V)."""
    Np = _round_up(N, _SUBLANE)

    ts = _largest_divisor_leq(S, 8)
    tn = _pick_col_tile(Vp, 2048)
    while tn > _LANE and ts * D * tn * 2 * 2 > _FLAT_W_BUDGET:
        tn = _pick_col_tile(Vp, tn - _LANE)
    while ts > 1 and ts * D * tn * 2 * 2 > _FLAT_W_BUDGET:
        ts = _largest_divisor_leq(S, ts - 1)
    ns = S // ts

    out_bytes = jnp.dtype(out_dtype).itemsize
    cost = pl.CostEstimate(
        flops=2 * Np * S * D * Vp,
        transcendentals=0,
        bytes_accessed=((Vp // tn) * S * Np * D * 2 + S * D * Vp * 2 + Vp * 4
                        + Np * Vp * out_bytes))

    call = pl.pallas_call(
        functools.partial(_flat_linear_kernel, ts=ts),
        out_shape=jax.ShapeDtypeStruct((Np, Vp), out_dtype),
        grid=(Vp // tn, ns),
        in_specs=[
            pl.BlockSpec((ts, Np, D), lambda j, s: (s, 0, 0)),
            pl.BlockSpec((ts, D, tn), lambda j, s: (s, 0, j)),
            pl.BlockSpec((1, tn), lambda j, s: (0, j)),
        ],
        out_specs=pl.BlockSpec((Np, tn), lambda j, s: (0, j)),
        scratch_shapes=[pltpu.VMEM((Np, tn), jnp.float32)],
        compiler_params=pltpu.CompilerParams(
            dimension_semantics=("parallel", "arbitrary"),
            vmem_limit_bytes=_VMEM_LIMIT),
        cost_estimate=cost,
    )

    def fn(x, w3, b_pad):
        xb = jnp.pad(x.astype(jnp.bfloat16), ((0, 0), (0, Np - N), (0, 0)))
        return call(xb, w3, b_pad)[:N, :V]

    return jax.jit(fn)


# --------------------------------------------------------------------------
# Generator module (JAX/Pallas port)
# --------------------------------------------------------------------------

class Generator:
    """JAX/Pallas port of the PyTorch Generator module."""

    def __init__(self, src_ntoken, tgt_ntoken, criterion_type, layers_param,
                 src_size, output_size, key, out_dtype=jnp.float32):
        self.d_model = layers_param['d_model']
        self.criterion_type = criterion_type
        self.src_size = src_size
        self.output_size = output_size
        self.src_ntoken = src_ntoken
        self.tgt_ntoken = tgt_ntoken
        self.m_type = 'transformer'
        self.out_dtype = out_dtype   # f32 default; bf16 halves output writeback

        special = (output_size == 1 or output_size == src_ntoken
                   or output_size == tgt_ntoken)
        in_features = self.d_model if special else src_size * self.d_model
        self.in_features = in_features

        # init_weights(): bias zero, weight ~ U(-0.1, 0.1), shape (out, in)
        initrange = 0.1
        self.weight = jax.random.uniform(
            key, (output_size, in_features), dtype=jnp.float32,
            minval=-initrange, maxval=initrange)
        self.bias = jnp.zeros((output_size,), dtype=jnp.float32)
        self.weight_t = jnp.asarray(self.weight.T)  # (in, out), f32 reference

        # Pre-materialized, lane-dense-padded kernel operands (one-time cost):
        V = output_size
        Vp = _round_up(V, _LANE)
        self._Vp = Vp
        self._w_pad = jnp.pad(self.weight_t.astype(jnp.bfloat16),
                              ((0, 0), (0, Vp - V)))           # (in, Vp) bf16
        self._b_pad = jnp.pad(self.bias, (0, Vp - V)).reshape(1, Vp)  # f32
        self._w_flat = (None if special else
                        self._w_pad.reshape(src_size, self.d_model, Vp))

    def __call__(self, x):
        V, Vp = self.output_size, self._Vp
        if self.criterion_type == 'cross_entropy_loss':
            if (V != 1 and V != self.src_ntoken and V != self.tgt_ntoken):
                # x: (S, N, d_model); transpose+flatten folded into the grid.
                S, N, D = x.shape
                fn = _build_flat_linear_call(S, N, D, V, Vp, self.out_dtype)
                return fn(x, self._w_flat, self._b_pad)
            lead = x.shape[:-1]
            x2d = x.reshape(-1, x.shape[-1])
            fn = _build_linear_call(x2d.shape[0], x2d.shape[1], V, Vp,
                                    self.out_dtype)
            return fn(x2d, self._w_pad, self._b_pad).reshape(lead + (V,))

        # log_softmax branch
        lead = x.shape[:-1]
        x2d = x.reshape(-1, x.shape[-1])
        M, D = x2d.shape
        if _use_full_v_softmax(D, Vp):
            fn = _build_logsoftmax_full_call(M, D, V, Vp, self.out_dtype)
        else:
            fn = _build_logsoftmax_tiled_call(M, D, V, Vp, self.out_dtype)
        return fn(x2d, self._w_pad, self._b_pad).reshape(lead + (V,))


# --------------------------------------------------------------------------
# Self-test
# --------------------------------------------------------------------------

if __name__ == "__main__":
    key = jax.random.PRNGKey(0)
    k_w, k_x, k_w2, k_x2, k_w3, k_w4, k_x4 = jax.random.split(key, 7)
    bf16 = jnp.bfloat16

    D = 32
    layers_param = {'d_model': D}
    src_ntoken = tgt_ntoken = 16

    # --- Branch 1: linear + log_softmax, small V (full-V kernel) ------------
    S, N = 8, 2
    gen = Generator(src_ntoken, tgt_ntoken, criterion_type='nll_loss',
                    layers_param=layers_param, src_size=S,
                    output_size=tgt_ntoken, key=k_w)
    x = jax.random.normal(k_x, (S, N, D), dtype=jnp.float32)
    out = jax.block_until_ready(gen(x))
    assert out.shape == (S, N, tgt_ntoken)
    logits = jnp.dot(x.reshape(-1, D).astype(bf16), gen.weight_t.astype(bf16),
                     preferred_element_type=jnp.float32) + gen.bias
    ref = jax.nn.log_softmax(logits, axis=-1).reshape(S, N, tgt_ntoken)
    assert jnp.allclose(out, ref, atol=1e-4, rtol=1e-4), "log_softmax mismatch"

    # --- Branch 1b: V-tiled two-pass log_softmax kernel (forced) ------------
    V_big = 1000
    gen_b = Generator(src_ntoken, V_big, criterion_type='nll_loss',
                      layers_param=layers_param, src_size=S,
                      output_size=V_big, key=k_w4)
    x_b = jax.random.normal(k_x4, (S, N, D), dtype=jnp.float32)
    out_full = gen_b(x_b)                       # heuristic -> full-V kernel
    x2d_b = x_b.reshape(-1, D)
    fn_tiled = _build_logsoftmax_tiled_call(x2d_b.shape[0], D, V_big,
                                            gen_b._Vp, jnp.float32)
    out_tiled = jax.block_until_ready(fn_tiled(x2d_b, gen_b._w_pad, gen_b._b_pad))
    logits_b = jnp.dot(x2d_b.astype(bf16), gen_b.weight_t.astype(bf16),
                       preferred_element_type=jnp.float32) + gen_b.bias
    ref_b = jax.nn.log_softmax(logits_b, axis=-1)
    assert out_tiled.shape == (x2d_b.shape[0], V_big)
    assert jnp.allclose(out_tiled, ref_b, atol=1e-3, rtol=1e-3), \
        "tiled log_softmax mismatch"
    assert jnp.allclose(out_full.reshape(-1, V_big), ref_b,
                        atol=1e-3, rtol=1e-3), "full-V log_softmax mismatch"

    # --- Branch 2: cross_entropy_loss with flattened (src_size*d_model) -----
    S2 = 12
    output_size = 24            # not 1 / src_ntoken / tgt_ntoken -> flatten path
    gen2 = Generator(src_ntoken, tgt_ntoken, criterion_type='cross_entropy_loss',
                     layers_param=layers_param, src_size=S2,
                     output_size=output_size, key=k_w2)
    x2 = jax.random.normal(k_x2, (S2, N, D), dtype=jnp.float32)
    out2 = jax.block_until_ready(gen2(x2))
    assert out2.shape == (N, output_size)
    xflat = jnp.transpose(x2, (1, 0, 2)).reshape(N, S2 * D).astype(bf16)
    ref2 = jnp.dot(xflat, gen2.weight_t.astype(bf16),
                   preferred_element_type=jnp.float32) + gen2.bias
    assert jnp.allclose(out2, ref2, atol=1e-3, rtol=1e-3), "flatten CE mismatch"

    # --- Branch 3: cross_entropy_loss, plain linear (output_size==tgt) ------
    gen3 = Generator(src_ntoken, tgt_ntoken, criterion_type='cross_entropy_loss',
                     layers_param=layers_param, src_size=S,
                     output_size=tgt_ntoken, key=k_w3)
    out3 = jax.block_until_ready(gen3(x))
    assert out3.shape == (S, N, tgt_ntoken)
    ref3 = (jnp.dot(x.reshape(-1, D).astype(bf16), gen3.weight_t.astype(bf16),
                    preferred_element_type=jnp.float32)
            + gen3.bias).reshape(S, N, tgt_ntoken)
    assert jnp.allclose(out3, ref3, atol=1e-4, rtol=1e-4), "plain CE mismatch"

    print("KERNEL_OK")
</pallas_src>

<mosaic_0001>
module attributes {stable_mosaic.version = 11 : i64} {
  func.func @_linear_logsoftmax_full_kernel(%arg0: i32, %arg1: memref<16x32xbf16, #tpu.memory_space<vmem>>, %arg2: memref<32x128xbf16, #tpu.memory_space<vmem>>, %arg3: memref<1x128xf32, #tpu.memory_space<vmem>>, %arg4: memref<16x128xf32, #tpu.memory_space<vmem>>) attributes {dimension_semantics = [#tpu.dimension_semantics<parallel>], iteration_bounds = array<i64: 1>, scalar_prefetch = 0 : i64, scratch_operands = 0 : i64, tpu.core_type = #tpu.core_type<tc>, window_params = [{transform_indices = @transform_0, window_bounds = array<i64: 16, 32>}, {pipeline_mode = #tpu.pipeline_mode<synchronous>, transform_indices = @transform_1, window_bounds = array<i64: 32, 128>}, {pipeline_mode = #tpu.pipeline_mode<synchronous>, transform_indices = @transform_2, window_bounds = array<i64: 1, 128>}, {transform_indices = @transform_3, window_bounds = array<i64: 16, 128>}]} {
    %c0 = arith.constant 0 : index
    %c0_0 = arith.constant 0 : index
    %0 = vector.load %arg1[%c0, %c0_0] : memref<16x32xbf16, #tpu.memory_space<vmem>>, vector<16x32xbf16>
    %c0_1 = arith.constant 0 : index
    %c0_2 = arith.constant 0 : index
    %1 = vector.load %arg2[%c0_1, %c0_2] : memref<32x128xbf16, #tpu.memory_space<vmem>>, vector<32x128xbf16>
    %cst = arith.constant dense<0.000000e+00> : vector<16x128xf32>
    %2 = tpu.matmul %0, %1, %cst {dimension_numbers = #tpu.dot_dimension_numbers<[1], [0], [0], [1], [0, 0, 1, 1], [], []>} : vector<16x32xbf16>, vector<32x128xbf16>, vector<16x128xf32> -> vector<16x128xf32>
    %c0_3 = arith.constant 0 : index
    %c0_4 = arith.constant 0 : index
    %3 = vector.load %arg3[%c0_3, %c0_4] : memref<1x128xf32, #tpu.memory_space<vmem>>, vector<1x128xf32>
    %4 = vector.broadcast %3 : vector<1x128xf32> to vector<16x128xf32>
    %5 = arith.addf %2, %4 : vector<16x128xf32>
    %6 = tpu.iota {dimensions = array<i32: 1>} : vector<16x128xi32>
    %c16_i32 = arith.constant 16 : i32
    %7 = vector.broadcast %c16_i32 : i32 to vector<16x128xi32>
    %8 = arith.cmpi slt, %6, %7 : vector<16x128xi32>
    %cst_5 = arith.constant -1.000000e+30 : f32
    %9 = vector.broadcast %cst_5 : f32 to vector<16x128xf32>
    %10 = arith.select %8, %5, %9 : vector<16x128xi1>, vector<16x128xf32>
    %cst_6 = arith.constant dense<0xFF800000> : vector<16xf32>
    %11 = vector.multi_reduction <maximumf>, %10, %cst_6 [1] : vector<16x128xf32> to vector<16xf32>
    %12 = vector.shape_cast %11 : vector<16xf32> to vector<16x1xf32>
    %13 = vector.broadcast %12 : vector<16x1xf32> to vector<16x128xf32>
    %14 = arith.subf %10, %13 : vector<16x128xf32>
    %15 = math.exp %14 : vector<16x128xf32>
    %cst_7 = arith.constant dense<0.000000e+00> : vector<16xf32>
    %16 = vector.multi_reduction <add>, %15, %cst_7 [1] : vector<16x128xf32> to vector<16xf32>
    %17 = vector.shape_cast %16 : vector<16xf32> to vector<16x1xf32>
    %18 = math.log %17 : vector<16x1xf32>
    %19 = vector.broadcast %18 : vector<16x1xf32> to vector<16x128xf32>
    %20 = arith.subf %14, %19 : vector<16x128xf32>
    %c0_8 = arith.constant 0 : index
    %c0_9 = arith.constant 0 : index
    %21 = vector.load %arg4[%c0_8, %c0_9] : memref<16x128xf32, #tpu.memory_space<vmem>>, vector<16x128xf32>
    tpu.vector_store %arg4[%c0_8, %c0_9], %20 {strides = array<i32>} : memref<16x128xf32, #tpu.memory_space<vmem>>, vector<16x128xf32>,
    return
  }
  func.func @transform_0(%arg0: i32) -> (i32, i32) {
    %c0_i32 = arith.constant 0 : i32
    %c0_i32_0 = arith.constant 0 : i32
    return %arg0, %c0_i32 : i32, i32
  }
  func.func @transform_1(%arg0: i32) -> (i32, i32) {
    %c0_i32 = arith.constant 0 : i32
    %c0_i32_0 = arith.constant 0 : i32
    %c0_i32_1 = arith.constant 0 : i32
    return %c0_i32, %c0_i32_0 : i32, i32
  }
  func.func @transform_2(%arg0: i32) -> (i32, i32) {
    %c0_i32 = arith.constant 0 : i32
    %c0_i32_0 = arith.constant 0 : i32
    %c0_i32_1 = arith.constant 0 : i32
    return %c0_i32, %c0_i32_0 : i32, i32
  }
  func.func @transform_3(%arg0: i32) -> (i32, i32) {
    %c0_i32 = arith.constant 0 : i32
    %c0_i32_0 = arith.constant 0 : i32
    return %arg0, %c0_i32 : i32, i32
  }
}

</mosaic_0001>

<llo_original>
// kernel: fn.1
$region0: #{fn.1}
  #allocation0 [shape = 'u32[]', space=smem, size = 0x4, offset = 0x4, fixed_abs, tag = 'smem constant byte address 0x4 - core index']
  #allocation1 [shape = 'u32[144,128]{1,0:T(1,128)}', space=vmem, size = 0x12000, scoped, tag = 'internal scratch']
  %s0 = inlined_call_operand.vmem [shape: bf16[16,32], index: 0, kind: input, shape index: {}]
  %s1 = inlined_call_operand.vmem [shape: bf16[32,128], index: 1, kind: input, shape index: {}]
  %s2 = inlined_call_operand.vmem [shape: f32[1,128], index: 2, kind: input, shape index: {}]
  %s3 = inlined_call_operand.hbm [shape: f32[16,128], index: 3, kind: output, shape index: {}]
  %s4 = sld [smem:[#allocation0]]
  $region22: #{fn.1} parent=0
    _
  %s6 = ssub.s32 1, %s4
  %s7 = scalar_select 0, %s6, %s4
  $region1: #{fn.1} parent=0
    #allocation2 [shape = 'u8[8192]{0}', space=vmem, size = 0x2000, scoped, tag = 'output window, operand 0, single buffered']
    #allocation3 [shape = 's32[1]{0}', space=sflag, size = 0x4, scoped, tag = 'scoped memory for fn.1']
    %8 = vsyncpa [#allocation3], 0
    // Predicated region
    $region2: #{fn.1} parent=1 // pred_check
      _
    $region3: #{fn.1} parent=1 // pred_check_branch
      %10 = sbr.rel (0) target = $region5
    $region4: #{fn.1} parent=1 // pred_region
      _
    $region5: #{fn.1} parent=1 // pred_fallthru
      _
    // Predicated region
    $region6: #{fn.1} parent=1 // pred_check
      _
    $region7: #{fn.1} parent=1 // pred_check_branch
      %12 = sbr.rel (0) target = $region9
    $region8: #{fn.1} parent=1 // pred_region
      _
    $region9: #{fn.1} parent=1 // pred_fallthru
      _
    // Predicated region
    $region10: #{fn.1} parent=1 // pred_check
      _
    $region11: #{fn.1} parent=1 // pred_check_branch
      %14 = sbr.rel (0) target = $region13
    $region12: #{fn.1} parent=1 // pred_region
      _
    $region13: #{fn.1} parent=1 // pred_fallthru
      _
    %v16 = vld [vmem:[%s0] sm:$0xf]
    %v17 = vld [vmem:[%s0 + $0x4] sm:$0xf]
    %v18 = vld [vmem:[%s1] sm:$0xf]
    %v19 = vld [vmem:[%s1 + $0x4] sm:$0xf]
    %v20 = vld [vmem:[%s1 + $0x8] sm:$0xf]
    %v21 = vld [vmem:[%s1 + $0xc] sm:$0xf]
    %v22 = vld [vmem:[%s2] sm:$0x1]
    %v24 = vlaneseq
    %v25 = vshrl.u32 %v24, 7
    %v26 = vsub.s32 0, %v25
    %v27 = vrot.slane %v22, %v26
    %v31 = vunpack.c.l.b16 %v16
    %v32 = vunpack.c.l.b16 %v17
    %v33 = vpack.c.b16 %v32, %v31
    %v38 = vunpack.c.l.b16 %v18
    %v39 = vunpack.c.l.b16 %v19
    %v40 = vunpack.c.l.b16 %v20
    %v41 = vunpack.c.l.b16 %v21
    %v42 = vpack.c.b16 %v39, %v38
    %v43 = vpack.c.b16 %v41, %v40
    %vm46 = vcmask 261120
    %v48 = vsel %vm46, %v33, 0
    %50 = vmatprep.subr.bf16.mxu0 0
    %51 = vmatpush1.bf16.msra.mxu0 %v42
    %52 = vmatprep.subr.bf16.mxu0 0
    %53 = vmatpush1.bf16.msra.mxu0 %v43
    %54 = vmatprep.subr.bf16.mxu0 0
    %55 = vmatpush1.bf16.msra.mxu0 0
    %56 = vmatprep.subr.bf16.mxu0 0
    %57 = vmatpush1.bf16.msra.mxu0 0
    %58 = vmatprep.subr.bf16.mxu0 0
    %59 = vmatpush1.bf16.msra.mxu0 0
    %60 = vmatprep.subr.bf16.mxu0 0
    %61 = vmatpush1.bf16.msra.mxu0 0
    %62 = vmatprep.subr.bf16.mxu0 0
    %63 = vmatpush1.bf16.msra.mxu0 0
    %64 = vmatprep.subr.bf16.mxu0 0
    %65 = vmatpush1.bf16.msra.mxu0 0
    %66 = vmatprep.subr.bf16.mxu0 0
    %67 = vmatpush1.bf16.msra.mxu0 0
    %68 = vmatprep.subr.bf16.mxu0 0
    %69 = vmatpush1.bf16.msra.mxu0 0
    %70 = vmatprep.subr.bf16.mxu0 0
    %71 = vmatpush1.bf16.msra.mxu0 0
    %72 = vmatprep.subr.bf16.mxu0 0
    %73 = vmatpush1.bf16.msra.mxu0 0
    %74 = vmatprep.subr.bf16.mxu0 0
    %75 = vmatpush1.bf16.msra.mxu0 0
    %76 = vmatprep.subr.bf16.mxu0 0
    %77 = vmatpush1.bf16.msra.mxu0 0
    %78 = vmatprep.subr.bf16.mxu0 0
    %79 = vmatpush1.bf16.msra.mxu0 0
    %80 = vmatprep.subr.bf16.mxu0 0
    %81 = vmatpush1.bf16.msra.mxu0 0
    %82 = vmatprep.mubr.bf16.mxu0 0
    %83 = vmatmul.mubr.bf16.gmra.mrb[0].mxu0 %v48
    %v84 = vpop.f32.mrb[0].mxu0
    %v85 = vadd.f32 %v27, %v84
    %v86 = vpop.f32.mrb[0].mxu0
    %v87 = vpop.f32.mrb[0].mxu0
    %v88 = vadd.f32 %v27, %v87
    %v89 = vpop.f32.mrb[0].mxu0
    %90 = vdwg.mxu0
    %v91 = vlaneseq
    %v92 = vand.u32 %v91, 127
    %vm93 = vcmp.lt.s32.totalorder %v92, 16
    %v94 = vsel %vm93, %v85, -1e+30
    %v95 = vsel %vm93, %v88, -1e+30
    %96 = vmax.xlane.f32.xlu0 %v94
    %v97 = vpop.xlane.xlu0 %96
    %98 = vmax.xlane.f32.xlu0 %v95
    %v99 = vpop.xlane.xlu0 %98
    %v100 = vsub.f32 %v94, %v97
    %v101 = vsub.f32 %v95, %v99
    %v102 = vmul.f32 %v100, 1.442695
    %v103 = vpow.pop %v102
    %v104 = vmul.f32 %v101, 1.442695
    %v105 = vpow.pop %v104
    %106 = vadd.xlane.f32.xlu0 %v103
    %v107 = vpop.xlane.xlu0 %106
    %108 = vadd.xlane.f32.xlu0 %v105
    %v109 = vpop.xlane.xlu0 %108
    %v110 = vlog2.pop %v107
    %v111 = vmul.f32 %v110, 0.6931472
    %v112 = vlog2.pop %v109
    %v113 = vmul.f32 %v112, 0.6931472
    %v114 = vsub.f32 %v100, %v111
    %v115 = vsub.f32 %v101, %v113
    %116 = vst [vmem:[#allocation2] sm:$0xff] %v114
    %117 = vst [vmem:[#allocation2 + $0x8] sm:$0xff] %v115
    // Predicated region
    $region14: #{fn.1} parent=1 // pred_check
      _
    $region15: #{fn.1} parent=1 // pred_check_branch
      %119 = sbr.rel (0) target = $region17
    $region16: #{fn.1} parent=1 // pred_region
      %s121 = ssub.s32 256, 256
      %122 = vsyncadd [#allocation3], %s121
      %s123 = sshll.u32 [#allocation2], 4
      %s124 = int_to_ptr.vmem [resolvable:$true] %s123
      %129 = dma.vmem_to_hbm [thread:$0]  %s124, 256, %s3, [#allocation3], 128, 128, 8
    $region17: #{fn.1} parent=1 // pred_fallthru
      _
    // Predicated region
    $region18: #{fn.1} parent=1 // pred_check
      _
    $region19: #{fn.1} parent=1 // pred_check_branch
      %131 = sbr.rel (0) target = $region21
    $region20: #{fn.1} parent=1 // pred_region
      %132 = dma.done [#allocation3], 256
    $region21: #{fn.1} parent=1 // pred_fallthru
      _
    %133 = vsyncpa [#allocation3], 1

</llo_original>
